<compile_context>
chip_gen: v6e
topology: v6e:2x2x1
jax: 0.10.0
libtpu: 0.0.40
codegen_flags: <defaults>
</compile_context>

<pallas_src>
import functools

import jax
import jax.numpy as jnp
from jax.experimental import pallas as pl
from jax.experimental.pallas import tpu as pltpu


_TILE_N_MAX = 512  # rows per grid step; 2 x (512*C*4B) double-buffered stays
                   # well inside v5e 16MiB / v6e 32MiB / v7x 32MiB scoped VMEM
                   # for typical C, and 512 is a multiple of 8 (sublane rule).


def _focal_loss_tile_kernel(logits_ref, targets_ref, out_ref, *,
                            gamma, tile_n, n_total):
    x = logits_ref[...].astype(jnp.float32)        # (tile_n, C), upcast post-DMA
    t = targets_ref[...]                           # (tile_n, 1) int32
    tn, c = x.shape

    # Mask rows past the true batch size (ragged last tile reads padding).
    pid = pl.program_id(0)
    row = pid * tile_n + jax.lax.broadcasted_iota(jnp.int32, (tn, 1), 0)
    valid = row < n_total                          # (tile_n, 1) bool

    # Fused, numerically-stable log-softmax evaluated only at the target class.
    m = jnp.max(x, axis=1, keepdims=True)
    shifted = x - m
    denom = jnp.sum(jnp.exp(shifted), axis=1, keepdims=True)
    col = jax.lax.broadcasted_iota(jnp.int32, (tn, c), 1)
    onehot = col == t                                               # scatter_(1, ids, 1)
    shifted_t = jnp.sum(jnp.where(onehot, shifted, 0.0), axis=1, keepdims=True)
    logp_t = shifted_t - jnp.log(denom)                             # (tile_n, 1)
    p_t = jnp.exp(logp_t)                                           # (tile_n, 1)

    one_minus_p = 1.0 - p_t
    g = float(gamma)
    if g.is_integer() and 0.0 <= g <= 8.0:
        # integer gamma (default 2): plain VPU multiplies, no exp/log, no log(0).
        focal = jnp.ones_like(one_minus_p)
        for _ in range(int(g)):
            focal = focal * one_minus_p
    else:
        focal = jnp.power(one_minus_p, jnp.float32(g))

    focal = jnp.where(valid, focal, 0.0)
    neg_logp = jnp.where(valid, -logp_t, 0.0)

    sum_focal = jnp.sum(focal)
    sum_neg_logp = jnp.sum(neg_logp)

    # Lane-dense (8, 128) partial block: [0,0]=sum_focal, [0,1]=sum_neg_logp,
    # zeros elsewhere -> full-width unmasked vector store.
    r8 = jax.lax.broadcasted_iota(jnp.int32, (8, 128), 0)
    c128 = jax.lax.broadcasted_iota(jnp.int32, (8, 128), 1)
    blk = (jnp.where((r8 == 0) & (c128 == 0), sum_focal, 0.0)
           + jnp.where((r8 == 0) & (c128 == 1), sum_neg_logp, 0.0))
    out_ref[...] = blk.astype(jnp.float32)


def focal_loss_pallas(logits, targets, *, gamma=2, size_average=True):
    """FocalLoss.forward(inputs, targets) -> scalar loss."""
    n, c = logits.shape
    targets2d = targets.reshape(n, 1).astype(jnp.int32)

    # Tile the batch: full N if small (block == full dim is always legal),
    # otherwise 512-row tiles (multiple of 8); ragged tail is masked in-kernel.
    tile_n = n if n <= _TILE_N_MAX else _TILE_N_MAX
    num_tiles = pl.cdiv(n, tile_n)

    kernel = functools.partial(
        _focal_loss_tile_kernel,
        gamma=float(gamma), tile_n=tile_n, n_total=n,
    )

    partials = pl.pallas_call(
        kernel,
        out_shape=jax.ShapeDtypeStruct((num_tiles * 8, 128), jnp.float32),
        grid_spec=pltpu.PrefetchScalarGridSpec(
            num_scalar_prefetch=0,
            grid=(num_tiles,),
            in_specs=[
                # logits: (tile_n, C) rows per step, C kept full (lane axis).
                # NOTE: for very small C (e.g. 4) only C of 128 lanes carry
                # data; HBM traffic (the real bound at scale) is still minimal.
                pl.BlockSpec((tile_n, c), lambda i: (i, 0)),
                # targets: matching (tile_n, 1) int32 rows.
                pl.BlockSpec((tile_n, 1), lambda i: (i, 0)),
            ],
            out_specs=pl.BlockSpec((8, 128), lambda i: (i, 0)),
        ),
        compiler_params=pltpu.CompilerParams(
            # No carried state -> batch axis is parallel (megacore on v7x).
            dimension_semantics=("parallel",),
            vmem_limit_bytes=32 * 1024 * 1024,
        ),
    )(logits, targets2d)   # logits DMA'd in native dtype (bf16 halves bytes)

    sum_focal = jnp.sum(partials[:, 0])        # zero rows contribute nothing
    sum_neg_logp = jnp.sum(partials[:, 1])
    total = sum_focal * sum_neg_logp
    if size_average:
        total = total / jnp.float32(n * n)     # full static batch, not per-tile
    return total


def focal_loss_ref(logits, targets, *, gamma=2, size_average=True):
    """Pure-JAX reference mirroring the PyTorch broadcast exactly."""
    n, c = logits.shape
    p = jax.nn.softmax(logits.astype(jnp.float32), axis=1)
    class_mask = jax.nn.one_hot(targets, c, dtype=jnp.float32)
    probs = jnp.sum(p * class_mask, axis=1).reshape(-1, 1)                 # (N, 1)
    log_p = jnp.sum(jax.nn.log_softmax(logits.astype(jnp.float32), axis=1)
                    * class_mask, axis=1)                                  # (N,)
    batch_loss = -jnp.power(1.0 - probs, jnp.float32(gamma)) * log_p       # (N, N)
    return batch_loss.mean() if size_average else batch_loss.sum()


if __name__ == "__main__":
    class_num = 4
    batch = 8

    # Deterministic "parameters": alpha = ones(class_num, 1); unused in forward.
    alpha = jnp.ones((class_num, 1), dtype=jnp.float32)
    gamma = 2
    size_average = True

    key = jax.random.PRNGKey(0)
    k_logits, k_targets = jax.random.split(key)
    logits = jax.random.normal(k_logits, (batch, class_num), dtype=jnp.float32)
    targets = jax.random.randint(k_targets, (batch,), 0, class_num, dtype=jnp.int32)

    loss = focal_loss_pallas(logits, targets, gamma=gamma, size_average=size_average)
    loss = jax.block_until_ready(loss)
    ref = focal_loss_ref(logits, targets, gamma=gamma, size_average=size_average)
    assert jnp.allclose(loss, ref, rtol=1e-5, atol=1e-5), (loss, ref)

    # Secondary check: multi-tile grid with a ragged last tile (masking path).
    k2a, k2b = jax.random.split(jax.random.PRNGKey(1))
    n2, c2 = 700, 40
    logits2 = jax.random.normal(k2a, (n2, c2), dtype=jnp.float32)
    targets2 = jax.random.randint(k2b, (n2,), 0, c2, dtype=jnp.int32)
    loss2 = jax.block_until_ready(
        focal_loss_pallas(logits2, targets2, gamma=gamma, size_average=size_average))
    ref2 = focal_loss_ref(logits2, targets2, gamma=gamma, size_average=size_average)
    assert jnp.allclose(loss2, ref2, rtol=1e-4, atol=1e-5), (loss2, ref2)

    print("KERNEL_OK")
</pallas_src>

<mosaic_0001>
module attributes {stable_mosaic.version = 11 : i64} {
  func.func @_focal_loss_tile_kernel(%arg0: i32, %arg1: memref<8x4xf32, #tpu.memory_space<vmem>>, %arg2: memref<8x1xi32, #tpu.memory_space<vmem>>, %arg3: memref<8x128xf32, #tpu.memory_space<vmem>>) attributes {dimension_semantics = [#tpu.dimension_semantics<parallel>], iteration_bounds = array<i64: 1>, scalar_prefetch = 0 : i64, scratch_operands = 0 : i64, tpu.core_type = #tpu.core_type<tc>, window_params = [{transform_indices = @transform_0, window_bounds = array<i64: 8, 4>}, {transform_indices = @transform_1, window_bounds = array<i64: 8, 1>}, {transform_indices = @transform_2, window_bounds = array<i64: 8, 128>}]} {
    %c0 = arith.constant 0 : index
    %c0_0 = arith.constant 0 : index
    %0 = vector.load %arg1[%c0, %c0_0] : memref<8x4xf32, #tpu.memory_space<vmem>>, vector<8x4xf32>
    %c0_1 = arith.constant 0 : index
    %c0_2 = arith.constant 0 : index
    %1 = vector.load %arg2[%c0_1, %c0_2] : memref<8x1xi32, #tpu.memory_space<vmem>>, vector<8x1xi32>
    %c8_i32 = arith.constant 8 : i32
    %2 = arith.muli %arg0, %c8_i32 : i32
    %3 = tpu.iota {dimensions = array<i32: 0>} : vector<8x1xi32>
    %4 = vector.broadcast %2 : i32 to vector<8x1xi32>
    %5 = arith.addi %4, %3 : vector<8x1xi32>
    %c8_i32_3 = arith.constant 8 : i32
    %6 = vector.broadcast %c8_i32_3 : i32 to vector<8x1xi32>
    %7 = arith.cmpi slt, %5, %6 : vector<8x1xi32>
    %cst = arith.constant dense<0xFF800000> : vector<8xf32>
    %8 = vector.multi_reduction <maximumf>, %0, %cst [1] : vector<8x4xf32> to vector<8xf32>
    %9 = vector.shape_cast %8 : vector<8xf32> to vector<8x1xf32>
    %10 = vector.broadcast %9 : vector<8x1xf32> to vector<8x4xf32>
    %11 = arith.subf %0, %10 : vector<8x4xf32>
    %12 = math.exp %11 : vector<8x4xf32>
    %cst_4 = arith.constant dense<0.000000e+00> : vector<8xf32>
    %13 = vector.multi_reduction <add>, %12, %cst_4 [1] : vector<8x4xf32> to vector<8xf32>
    %14 = vector.shape_cast %13 : vector<8xf32> to vector<8x1xf32>
    %15 = tpu.iota {dimensions = array<i32: 1>} : vector<8x4xi32>
    %16 = vector.broadcast %1 : vector<8x1xi32> to vector<8x4xi32>
    %17 = arith.cmpi eq, %15, %16 : vector<8x4xi32>
    %cst_5 = arith.constant 0.000000e+00 : f32
    %18 = vector.broadcast %cst_5 : f32 to vector<8x4xf32>
    %19 = arith.select %17, %11, %18 : vector<8x4xi1>, vector<8x4xf32>
    %cst_6 = arith.constant dense<0.000000e+00> : vector<8xf32>
    %20 = vector.multi_reduction <add>, %19, %cst_6 [1] : vector<8x4xf32> to vector<8xf32>
    %21 = vector.shape_cast %20 : vector<8xf32> to vector<8x1xf32>
    %22 = math.log %14 : vector<8x1xf32>
    %23 = arith.subf %21, %22 : vector<8x1xf32>
    %24 = math.exp %23 : vector<8x1xf32>
    %cst_7 = arith.constant 1.000000e+00 : f32
    %25 = vector.broadcast %cst_7 : f32 to vector<8x1xf32>
    %26 = arith.subf %25, %24 : vector<8x1xf32>
    %cst_8 = arith.constant 1.000000e+00 : f32
    %27 = vector.broadcast %cst_8 : f32 to vector<8x1xf32>
    %28 = arith.mulf %27, %26 : vector<8x1xf32>
    %29 = arith.mulf %28, %26 : vector<8x1xf32>
    %cst_9 = arith.constant 0.000000e+00 : f32
    %30 = vector.broadcast %cst_9 : f32 to vector<8x1xf32>
    %31 = arith.select %7, %29, %30 : vector<8x1xi1>, vector<8x1xf32>
    %cst_10 = arith.constant 0.000000e+00 : f32
    %32 = vector.broadcast %cst_10 : f32 to vector<8x1xf32>
    %33 = arith.subf %32, %23 : vector<8x1xf32>
    %cst_11 = arith.constant 0.000000e+00 : f32
    %34 = vector.broadcast %cst_11 : f32 to vector<8x1xf32>
    %35 = arith.select %7, %33, %34 : vector<8x1xi1>, vector<8x1xf32>
    %36 = vector.shape_cast %31 : vector<8x1xf32> to vector<1x8x1xf32>
    %cst_12 = arith.constant dense<0.000000e+00> : vector<1xf32>
    %37 = vector.multi_reduction <add>, %36, %cst_12 [1, 2] : vector<1x8x1xf32> to vector<1xf32>
    %38 = vector.shape_cast %37 : vector<1xf32> to vector<1x1x1xf32>
    %39 = vector.extract %38[0, 0, 0] : f32 from vector<1x1x1xf32>
    %40 = vector.shape_cast %35 : vector<8x1xf32> to vector<1x8x1xf32>
    %cst_13 = arith.constant dense<0.000000e+00> : vector<1xf32>
    %41 = vector.multi_reduction <add>, %40, %cst_13 [1, 2] : vector<1x8x1xf32> to vector<1xf32>
    %42 = vector.shape_cast %41 : vector<1xf32> to vector<1x1x1xf32>
    %43 = vector.extract %42[0, 0, 0] : f32 from vector<1x1x1xf32>
    %44 = tpu.iota {dimensions = array<i32: 0>} : vector<8x128xi32>
    %45 = tpu.iota {dimensions = array<i32: 1>} : vector<8x128xi32>
    %c0_i32 = arith.constant 0 : i32
    %46 = vector.broadcast %c0_i32 : i32 to vector<8x128xi32>
    %47 = arith.cmpi eq, %44, %46 : vector<8x128xi32>
    %c0_i32_14 = arith.constant 0 : i32
    %48 = vector.broadcast %c0_i32_14 : i32 to vector<8x128xi32>
    %49 = arith.cmpi eq, %45, %48 : vector<8x128xi32>
    %50 = arith.andi %47, %49 : vector<8x128xi1>
    %cst_15 = arith.constant 0.000000e+00 : f32
    %51 = vector.broadcast %39 : f32 to vector<8x128xf32>
    %52 = vector.broadcast %cst_15 : f32 to vector<8x128xf32>
    %53 = arith.select %50, %51, %52 : vector<8x128xi1>, vector<8x128xf32>
    %c0_i32_16 = arith.constant 0 : i32
    %54 = vector.broadcast %c0_i32_16 : i32 to vector<8x128xi32>
    %55 = arith.cmpi eq, %44, %54 : vector<8x128xi32>
    %c1_i32 = arith.constant 1 : i32
    %56 = vector.broadcast %c1_i32 : i32 to vector<8x128xi32>
    %57 = arith.cmpi eq, %45, %56 : vector<8x128xi32>
    %58 = arith.andi %55, %57 : vector<8x128xi1>
    %cst_17 = arith.constant 0.000000e+00 : f32
    %59 = vector.broadcast %43 : f32 to vector<8x128xf32>
    %60 = vector.broadcast %cst_17 : f32 to vector<8x128xf32>
    %61 = arith.select %58, %59, %60 : vector<8x128xi1>, vector<8x128xf32>
    %62 = arith.addf %53, %61 : vector<8x128xf32>
    %c0_18 = arith.constant 0 : index
    %c0_19 = arith.constant 0 : index
    %63 = vector.load %arg3[%c0_18, %c0_19] : memref<8x128xf32, #tpu.memory_space<vmem>>, vector<8x128xf32>
    tpu.vector_store %arg3[%c0_18, %c0_19], %62 {strides = array<i32>} : memref<8x128xf32, #tpu.memory_space<vmem>>, vector<8x128xf32>,
    return
  }
  func.func @transform_0(%arg0: i32) -> (i32, i32) {
    %c0_i32 = arith.constant 0 : i32
    %c0_i32_0 = arith.constant 0 : i32
    return %arg0, %c0_i32 : i32, i32
  }
  func.func @transform_1(%arg0: i32) -> (i32, i32) {
    %c0_i32 = arith.constant 0 : i32
    %c0_i32_0 = arith.constant 0 : i32
    return %arg0, %c0_i32 : i32, i32
  }
  func.func @transform_2(%arg0: i32) -> (i32, i32) {
    %c0_i32 = arith.constant 0 : i32
    %c0_i32_0 = arith.constant 0 : i32
    return %arg0, %c0_i32 : i32, i32
  }
}

</mosaic_0001>

<llo_original>
// kernel: tpu_custom_call.1
$region0: #{tpu_custom_call.1}
  #allocation0 [shape = 'u32[]', space=smem, size = 0x4, offset = 0x4, fixed_abs, tag = 'smem constant byte address 0x4 - core index']
  #allocation1 [shape = 'u32[144,128]{1,0:T(1,128)}', space=vmem, size = 0x12000, scoped, tag = 'internal scratch']
  %s0 = inlined_call_operand.vmem [shape: f32[8,4], index: 0, kind: input, shape index: {}]
  %s1 = inlined_call_operand.vmem [shape: s32[8,1], index: 1, kind: input, shape index: {}]
  %s2 = inlined_call_operand.hbm [shape: f32[8,128], index: 2, kind: output, shape index: {}]
  %s3 = sld [smem:[#allocation0]]
  $region18: #{tpu_custom_call.1} parent=0
    _
  %s5 = ssub.s32 1, %s3
  %s6 = scalar_select 0, %s5, %s3
  $region1: #{tpu_custom_call.1} parent=0
    #allocation2 [shape = 'u8[4096]{0}', space=vmem, size = 0x1000, scoped, tag = 'output window, operand 0, single buffered']
    #allocation3 [shape = 's32[1]{0}', space=sflag, size = 0x4, scoped, tag = 'scoped memory for tpu_custom_call.1']
    %7 = vsyncpa [#allocation3], 0
    // Predicated region
    $region2: #{tpu_custom_call.1} parent=1 // pred_check
      _
    $region3: #{tpu_custom_call.1} parent=1 // pred_check_branch
      %9 = sbr.rel (0) target = $region5
    $region4: #{tpu_custom_call.1} parent=1 // pred_region
      _
    $region5: #{tpu_custom_call.1} parent=1 // pred_fallthru
      _
    // Predicated region
    $region6: #{tpu_custom_call.1} parent=1 // pred_check
      _
    $region7: #{tpu_custom_call.1} parent=1 // pred_check_branch
      %11 = sbr.rel (0) target = $region9
    $region8: #{tpu_custom_call.1} parent=1 // pred_region
      _
    $region9: #{tpu_custom_call.1} parent=1 // pred_fallthru
      _
    %v12 = vld [vmem:[%s0] sm:$0xff]
    %v13 = vld [vmem:[%s1] sm:$0xff]
    %s14 = smul.u32 0, 8
    %v15 = vlaneseq
    %v16 = vshrl.u32 %v15, 7
    %v17 = vstv %s14
    %v18 = vadd.s32 %v17, %v16
    %vm19 = vcmp.lt.s32.totalorder %v18, 8
    %vm20 = vcmask 31744
    %v21 = vsel %vm20, %v12, -inf
    %22 = vmax.xlane.f32.xlu0 %v21
    %v23 = vpop.xlane.xlu0 %22
    %v24 = vsub.f32 %v12, %v23
    %v25 = vmul.f32 %v24, 1.442695
    %v26 = vpow.pop %v25
    %v27 = vsel %vm20, %v26, 0.0
    %28 = vadd.xlane.f32.xlu0 %v27
    %v29 = vpop.xlane.xlu0 %28
    %v30 = vlaneseq
    %v31 = vand.u32 %v30, 127
    %32 = vset.pattern.permute.xlu0 0
    %33 = vperm.xlu0 %32, %v13
    %v34 = vpop.permute.xlu0 %33
    %vm35 = vcmp.eq.s32.totalorder %v31, %v34
    %v36 = vsel %vm35, %v24, 0.0
    %v37 = vsel %vm20, %v36, 0.0
    %38 = vadd.xlane.f32.xlu0 %v37
    %v39 = vpop.xlane.xlu0 %38
    %v40 = vlog2.pop %v29
    %v41 = vmul.f32 %v40, 0.6931472
    %v42 = vsub.f32 %v39, %v41
    %v43 = vmul.f32 %v42, 1.442695
    %v44 = vpow.pop %v43
    %v45 = vsub.f32 1.0, %v44
    %v46 = vmul.f32 %v45, %v45
    %v47 = vsel %vm19, %v46, 0.0
    %v48 = vsub.f32 0.0, %v42
    %v49 = vsel %vm19, %v48, 0.0
    %vm50 = vcmask 7168
    %v51 = vsel %vm50, %v47, 0.0
    %52 = vadd.xlane.f32.xlu0 %v51
    %v53 = vpop.xlane.xlu0 %52
    %v54 = vrot.slane %v53, 4
    %v55 = vadd.f32 %v53, %v54
    %v56 = vrot.slane %v55, 2
    %v57 = vadd.f32 %v55, %v56
    %v58 = vrot.slane %v57, 1
    %v59 = vadd.f32 %v57, %v58
    %s60 = vtos %v59
    %v61 = vsel %vm50, %v49, 0.0
    %62 = vadd.xlane.f32.xlu0 %v61
    %v63 = vpop.xlane.xlu0 %62
    %v64 = vrot.slane %v63, 4
    %v65 = vadd.f32 %v63, %v64
    %v66 = vrot.slane %v65, 2
    %v67 = vadd.f32 %v65, %v66
    %v68 = vrot.slane %v67, 1
    %v69 = vadd.f32 %v67, %v68
    %s70 = vtos %v69
    %vm71 = vcmp.eq.s32.totalorder %v16, 0
    %vm72 = vcmp.eq.s32.totalorder %v31, 0
    %vm73 = vmand %vm71, %vm72
    %v74 = vstv %s60
    %v75 = vsel %vm73, %v74, 0.0
    %vm76 = vcmp.eq.s32.totalorder %v31, 1
    %vm77 = vmand %vm71, %vm76
    %v78 = vstv %s70
    %v79 = vsel %vm77, %v78, 0.0
    %v80 = vadd.f32 %v75, %v79
    %81 = vst [vmem:[#allocation2] sm:$0xff] %v80
    // Predicated region
    $region10: #{tpu_custom_call.1} parent=1 // pred_check
      _
    $region11: #{tpu_custom_call.1} parent=1 // pred_check_branch
      %83 = sbr.rel (0) target = $region13
    $region12: #{tpu_custom_call.1} parent=1 // pred_region
      %s85 = ssub.s32 128, 128
      %86 = vsyncadd [#allocation3], %s85
      %s88 = sshll.u32 [#allocation2], 4
      %s89 = int_to_ptr.vmem [resolvable:$true] %s88
      %91 = dma.vmem_to_hbm [thread:$0]  %s89, 128, %s2, [#allocation3]
    $region13: #{tpu_custom_call.1} parent=1 // pred_fallthru
      _
    // Predicated region
    $region14: #{tpu_custom_call.1} parent=1 // pred_check
      _
    $region15: #{tpu_custom_call.1} parent=1 // pred_check_branch
      %93 = sbr.rel (0) target = $region17
    $region16: #{tpu_custom_call.1} parent=1 // pred_region
      %94 = dma.done [#allocation3], 128
    $region17: #{tpu_custom_call.1} parent=1 // pred_fallthru
      _
    %95 = vsyncpa [#allocation3], 1

</llo_original>
